<compile_context>
chip_gen: v7x
topology: tpu7x:2x2x1
jax: 0.10.0
libtpu: 0.0.40
codegen_flags: <defaults>
</compile_context>

<pallas_src>
import functools

import jax
import jax.numpy as jnp
from jax.experimental import pallas as pl
from jax.experimental.pallas import tpu as pltpu

LANE = 128
SUBLANE = 8
MAX_TILE_ROWS = 8192


def _round_up(x, m):
    return ((x + m - 1) // m) * m


def _pad_to(a, shape):
    pads = [(0, t - s) for s, t in zip(a.shape, shape)]
    return jnp.pad(a, pads)


def _apply_act(x, activation):
    if activation is None:
        return x
    if activation == "tanh":
        return jnp.tanh(x)          # EUP slot
    if activation == "relu":
        return jnp.maximum(x, 0.0)  # VPU slot
    raise ValueError(f"unsupported activation: {activation}")


def _tpu_generation():
    """Return (vmem_budget_bytes, num_tensorcores) for the local chip."""
    try:
        kind = jax.devices()[0].device_kind.lower()
    except Exception:
        kind = ""
    if "v7" in kind:                   # 64 MiB physical VMEM, 2 TC / chip
        return 40 * 1024 * 1024, 2
    if "v5" in kind or "v6" in kind:   # 128 MiB physical VMEM, 1 TC / chip
        return 96 * 1024 * 1024, 1
    return 40 * 1024 * 1024, 1         # unknown generation: be conservative


# ---------------------------------------------------------------------------
# Fused MLP kernel: every layer in one body, activations never leave VMEM.
# ---------------------------------------------------------------------------
def _fused_mlp_kernel(*refs, num_mid, activations, matmul_dtype):
    # refs = (x, c1, w1d, [W_i, b_i] * num_mid, w_last, b_last, out)
    x_ref, c1_ref, w1d_ref = refs[0], refs[1], refs[2]
    wb_refs = refs[3:3 + 2 * num_mid]
    wlast_ref = refs[3 + 2 * num_mid]
    blast_ref = refs[4 + 2 * num_mid]
    o_ref = refs[5 + 2 * num_mid]

    def mm(a, w_ref):
        # MXU matmul; activations cast to the operand dtype, weights already
        # stored in that dtype at init; accumulation always f32.
        return jnp.dot(a.astype(matmul_dtype), w_ref[...],
                       preferred_element_type=jnp.float32)

    # Layer 0.  c1 already contains  params @ W1_param + b1  (grid-invariant,
    # folded into the bias on the host), so only the data rows hit the MXU.
    h = mm(x_ref[...], w1d_ref) + c1_ref[...]
    h = _apply_act(h, activations[0])

    # Middle layers (lane-padded widths -> dense MXU tiles; zero padding
    # contributes nothing and tanh(0)=relu(0)=0 keeps padded columns zero).
    for li in range(num_mid):
        w_ref = wb_refs[2 * li]
        b_ref = wb_refs[2 * li + 1]
        h = mm(h, w_ref) + b_ref[...]
        h = _apply_act(h, activations[1 + li])

    # Final Linear(H, 1): VPU multiply + XLU lane reduction -> (TM, 1) store.
    o = jnp.sum(h * wlast_ref[...], axis=-1, keepdims=True) + blast_ref[...]
    o_ref[...] = o.astype(o_ref.dtype)


# ---------------------------------------------------------------------------
# NNBBOptimizer (JAX / Pallas version)
# ---------------------------------------------------------------------------
class NNBBOptimizerPallas:
    """MLP over [flatten(batch_X) ++ broadcast(params ++ taus ++ R_diag)]."""

    def __init__(self, decoder_nn_params, observed_dims, timesteps, taus,
                 R_diag, layers_list, key):
        assert len(layers_list) >= 1, "need at least one hidden layer"
        nn_parameter_inputs = jnp.concatenate(
            [jnp.ravel(p) for p in decoder_nn_params])
        total_parameter_inputs = jnp.concatenate(
            (nn_parameter_inputs, taus, R_diag))
        self.total_parameter_size = int(total_parameter_inputs.shape[0])
        self.data_size = observed_dims * timesteps
        self.input_dim = self.data_size + self.total_parameter_size

        # ---- logical layers (same init scheme as before) -------------------
        self.layers = []
        input_size = self.input_dim
        sizes_acts = list(layers_list) + [(1, None)]
        for size, activation in sizes_acts:
            key, kw, kb = jax.random.split(key, 3)
            bound = 1.0 / (float(input_size) ** 0.5)
            W = jax.random.uniform(kw, (input_size, size), jnp.float32,
                                   -bound, bound)
            b = jax.random.uniform(kb, (size,), jnp.float32, -bound, bound)
            self.layers.append((W, b, activation))
            input_size = size
        self.num_layers = len(self.layers)
        self.activations = tuple(a for _, _, a in self.layers)
        self.out_dim = 1

        # ---- padded / split weights for the fused kernel -------------------
        W1, b1, _ = self.layers[0]
        H1p = _round_up(int(W1.shape[1]), LANE)
        self.h1_pad = H1p
        self.w1_data_f32 = _pad_to(W1[:self.data_size, :],
                                   (self.data_size, H1p))
        self.w1_param = W1[self.data_size:, :]           # (P, H1)  stays f32
        self.b1 = b1                                     # (H1,)    stays f32

        self.mid_f32 = []                                # (Wp, bp) per layer
        prev_pad = H1p
        for (W, b, _) in self.layers[1:-1]:
            out_pad = _round_up(int(W.shape[1]), LANE)
            self.mid_f32.append((_pad_to(W, (prev_pad, out_pad)),
                                 _pad_to(b.reshape(1, -1), (1, out_pad))))
            prev_pad = out_pad
        self.prev_pad = prev_pad

        Wl, bl, _ = self.layers[-1]                      # (prev, 1), (1,)
        self.w_last = _pad_to(Wl[:, 0].reshape(1, -1), (1, prev_pad))
        self.b_last = bl.reshape(1, 1)

        self._weight_cache = {}                          # dtype -> weights
        self.vmem_budget, self.num_cores = _tpu_generation()

    # ------------------------------------------------------------ helpers
    def _mxu_weights(self, dtype):
        key = jnp.dtype(dtype).name
        if key not in self._weight_cache:
            w1d = self.w1_data_f32.astype(dtype)
            mids = [(W.astype(dtype), b) for (W, b) in self.mid_f32]
            self._weight_cache[key] = (w1d, mids)
        return self._weight_cache[key]

    def _pick_tile(self, B, mxu_itemsize):
        """Batch tile size from a generation-aware VMEM budget."""
        hidden_widths = [self.h1_pad] + [W.shape[1] for W, _ in self.mid_f32]
        # Live f32 intermediates per row + double-buffered x / (B,1) out.
        per_row = 4 * (sum(hidden_widths) + 2 * self.data_size + 2)
        resident = mxu_itemsize * (self.w1_data_f32.size
                                   + sum(W.size for W, _ in self.mid_f32))
        resident += 4 * (self.h1_pad
                         + sum(b.size for _, b in self.mid_f32)
                         + self.w_last.size + 1)
        avail = self.vmem_budget - 2 * resident - (4 << 20)   # headroom
        tm_cap = max(SUBLANE, (avail // per_row) // SUBLANE * SUBLANE)
        tm_cap = min(tm_cap, MAX_TILE_ROWS)
        # Aim for >= num_cores grid steps so the "parallel" batch axis can
        # shard across TensorCores (matters on v7x; no-op on v5e/v6e).
        tm_target = _round_up(max(1, pl.cdiv(B, self.num_cores)), SUBLANE)
        tm = int(max(SUBLANE, min(tm_cap, tm_target)))
        return tm, per_row, resident

    # ------------------------------------------------------------------ fwd
    def __call__(self, batch_X, decoder_nn_params, taus, R_diag, *,
                 matmul_dtype=jnp.float32):
        nn_parameter_inputs = jnp.concatenate(
            [jnp.ravel(p) for p in decoder_nn_params])
        total_parameter_inputs = jnp.concatenate(
            (nn_parameter_inputs, taus, R_diag)).astype(jnp.float32)

        B = int(batch_X.shape[0])
        x_data = batch_X.reshape(B, self.data_size).astype(jnp.float32)

        # Grid-invariant parameter contribution folded into the first bias:
        # c1 = params @ W1_param + b1  (tiny (1,P)@(P,H1) XLA op, once/call).
        c1 = total_parameter_inputs @ self.w1_param + self.b1
        c1 = _pad_to(c1.reshape(1, -1), (1, self.h1_pad))

        w1d, mids = self._mxu_weights(matmul_dtype)
        mxu_itemsize = jnp.dtype(matmul_dtype).itemsize

        TM, per_row, resident = self._pick_tile(B, mxu_itemsize)
        nsteps = pl.cdiv(B, TM)

        # NOTE: when B is not a multiple of TM, the last grid step reads past
        # the end of x_data (stale VMEM rows run through the MLP).  They are
        # masked on the (TM, 1) output store, so valid rows are unaffected.
        # Do NOT add row-coupled ops (e.g. batch reductions) to the kernel.

        vmem_limit = int(min(self.vmem_budget,
                             max(32 << 20,
                                 TM * per_row + 2 * resident + (8 << 20))))

        # ---- cost estimate (advisory) --------------------------------------
        flops = 2 * B * self.data_size * self.h1_pad
        prev = self.h1_pad
        for (Wp, _) in mids:
            flops += 2 * B * Wp.shape[0] * Wp.shape[1]
            prev = Wp.shape[1]
        flops += 2 * B * prev                                  # final reduce
        hidden_widths = [self.h1_pad] + [W.shape[1] for W, _ in mids]
        transcendentals = sum(B * w for a, w in
                              zip(self.activations, hidden_widths)
                              if a == "tanh")
        bytes_accessed = (
            x_data.size * 4 + c1.size * 4
            + w1d.size * mxu_itemsize
            + sum(W.size * mxu_itemsize + b.size * 4 for W, b in mids)
            + self.w_last.size * 4 + 4
            + B * 4)

        kernel = functools.partial(
            _fused_mlp_kernel,
            num_mid=len(mids),
            activations=self.activations,
            matmul_dtype=matmul_dtype)

        def const_spec(shape, single_buffer):
            idx = lambda i, _s=shape: (0,) * len(_s)
            if single_buffer:
                # Grid-invariant operand: no need for a double buffer.
                return pl.BlockSpec(shape, idx,
                                    pipeline_mode=pl.Buffered(1))
            return pl.BlockSpec(shape, idx)

        def run(single_buffer):
            in_specs = [
                pl.BlockSpec((TM, self.data_size), lambda i: (i, 0)),
                const_spec(c1.shape, single_buffer),
                const_spec(w1d.shape, single_buffer),
            ]
            call_args = [x_data, c1, w1d]
            for (Wp, bp) in mids:
                in_specs.append(const_spec(Wp.shape, single_buffer))
                in_specs.append(const_spec(bp.shape, single_buffer))
                call_args.extend([Wp, bp])
            in_specs.append(const_spec(self.w_last.shape, single_buffer))
            in_specs.append(const_spec(self.b_last.shape, single_buffer))
            call_args.extend([self.w_last, self.b_last])

            return pl.pallas_call(
                kernel,
                out_shape=jax.ShapeDtypeStruct((B, 1), jnp.float32),
                grid=(nsteps,),
                in_specs=in_specs,
                out_specs=pl.BlockSpec((TM, 1), lambda i: (i, 0)),
                compiler_params=pltpu.CompilerParams(
                    dimension_semantics=("parallel",),
                    vmem_limit_bytes=vmem_limit),
                cost_estimate=pl.CostEstimate(
                    flops=int(flops),
                    transcendentals=int(transcendentals),
                    bytes_accessed=int(bytes_accessed)),
            )(*call_args)

        try:
            return run(single_buffer=True)
        except Exception:
            # pipeline_mode=pl.Buffered(1) unsupported on this jax build;
            # fall back to default double-buffered resident operands.
            return run(single_buffer=False)

    # ------------------------------------------------- pure-JAX reference
    def reference(self, batch_X, decoder_nn_params, taus, R_diag):
        nn_parameter_inputs = jnp.concatenate(
            [jnp.ravel(p) for p in decoder_nn_params])
        total_parameter_inputs = jnp.concatenate(
            (nn_parameter_inputs, taus, R_diag))
        batch_size = batch_X.shape[0]
        batched_params = jnp.broadcast_to(
            total_parameter_inputs[None, :],
            (batch_size, total_parameter_inputs.shape[0]))
        x = jnp.concatenate(
            (batch_X.reshape(batch_size, -1), batched_params), axis=1)
        for W, b, activation in self.layers:
            x = x @ W + b[None, :]
            x = _apply_act(x, activation)
        return x


# ---------------------------------------------------------------------------
# main
# ---------------------------------------------------------------------------
if __name__ == "__main__":
    key = jax.random.PRNGKey(0)

    # Small synthetic "decoder network" parameters: one Linear(4, 4).
    observed_dims = 4
    timesteps = 4
    latent_dims = 4
    batch = 2

    key, k1, k2, k3, k4, k5, kmodel = jax.random.split(key, 7)
    decoder_W = jax.random.normal(k1, (observed_dims, latent_dims),
                                  jnp.float32)
    decoder_b = jax.random.normal(k2, (observed_dims,), jnp.float32)
    decoder_nn_params = [decoder_W, decoder_b]          # 16 + 4 = 20 params

    taus = jax.random.uniform(k3, (latent_dims,), jnp.float32)      # 4
    R_diag = jax.random.uniform(k4, (observed_dims,), jnp.float32)  # 4

    # layers_list = [(32, Tanh), (32, ReLU)]; final Linear(., 1) added inside.
    layers_list = [(32, "tanh"), (32, "relu")]

    model = NNBBOptimizerPallas(decoder_nn_params, observed_dims, timesteps,
                                taus, R_diag, layers_list, kmodel)

    batch_X = jax.random.normal(k5, (batch, timesteps, observed_dims),
                                jnp.float32)

    # f32 MXU path: exact match with the pure-JAX reference.
    out = model(batch_X, decoder_nn_params, taus, R_diag)
    out = jax.block_until_ready(out)

    ref = model.reference(batch_X, decoder_nn_params, taus, R_diag)
    assert out.shape == (batch, 1), out.shape
    assert jnp.allclose(out, ref, atol=1e-5, rtol=1e-5), (out, ref)

    # bf16-operand / f32-accumulate MXU path (weights pre-cast once at init);
    # checked against the f32 reference at a correspondingly looser tolerance.
    # TODO(synk): optionally run tanh in bf16 on v6e/v7x only (bf16 EUP).
    out_bf16 = jax.block_until_ready(
        model(batch_X, decoder_nn_params, taus, R_diag,
              matmul_dtype=jnp.bfloat16))
    assert out_bf16.shape == (batch, 1), out_bf16.shape
    assert jnp.allclose(out_bf16, ref, atol=5e-2, rtol=5e-2), (out_bf16, ref)

    print("KERNEL_OK")
</pallas_src>

<mosaic_0001>
module attributes {stable_mosaic.version = 11 : i64} {
  func.func @_fused_mlp_kernel(%arg0: i32, %arg1: memref<8x16xf32, #tpu.memory_space<vmem>>, %arg2: memref<1x128xf32, #tpu.memory_space<vmem>>, %arg3: memref<16x128xf32, #tpu.memory_space<vmem>>, %arg4: memref<128x128xf32, #tpu.memory_space<vmem>>, %arg5: memref<1x128xf32, #tpu.memory_space<vmem>>, %arg6: memref<1x128xf32, #tpu.memory_space<vmem>>, %arg7: memref<1x1xf32, #tpu.memory_space<vmem>>, %arg8: memref<8x1xf32, #tpu.memory_space<vmem>>) attributes {dimension_semantics = [#tpu.dimension_semantics<parallel>], iteration_bounds = array<i64: 1>, scalar_prefetch = 0 : i64, scratch_operands = 0 : i64, tpu.core_type = #tpu.core_type<tc>, window_params = [{transform_indices = @transform_0, window_bounds = array<i64: 8, 16>}, {pipeline_mode = #tpu.pipeline_mode<synchronous>, transform_indices = @transform_1, window_bounds = array<i64: 1, 128>}, {pipeline_mode = #tpu.pipeline_mode<synchronous>, transform_indices = @transform_2, window_bounds = array<i64: 16, 128>}, {pipeline_mode = #tpu.pipeline_mode<synchronous>, transform_indices = @transform_3, window_bounds = array<i64: 128, 128>}, {pipeline_mode = #tpu.pipeline_mode<synchronous>, transform_indices = @transform_4, window_bounds = array<i64: 1, 128>}, {pipeline_mode = #tpu.pipeline_mode<synchronous>, transform_indices = @transform_5, window_bounds = array<i64: 1, 128>}, {pipeline_mode = #tpu.pipeline_mode<synchronous>, transform_indices = @transform_6, window_bounds = array<i64: 1, 1>}, {transform_indices = @transform_7, window_bounds = array<i64: 8, 1>}]} {
    %c0 = arith.constant 0 : index
    %c0_0 = arith.constant 0 : index
    %0 = vector.load %arg1[%c0, %c0_0] : memref<8x16xf32, #tpu.memory_space<vmem>>, vector<8x16xf32>
    %c0_1 = arith.constant 0 : index
    %c0_2 = arith.constant 0 : index
    %1 = vector.load %arg3[%c0_1, %c0_2] : memref<16x128xf32, #tpu.memory_space<vmem>>, vector<16x128xf32>
    %cst = arith.constant dense<0.000000e+00> : vector<8x128xf32>
    %2 = tpu.matmul %0, %1, %cst {dimension_numbers = #tpu.dot_dimension_numbers<[1], [0], [0], [1], [0, 0, 1, 1], [], []>} : vector<8x16xf32>, vector<16x128xf32>, vector<8x128xf32> -> vector<8x128xf32>
    %c0_3 = arith.constant 0 : index
    %c0_4 = arith.constant 0 : index
    %3 = vector.load %arg2[%c0_3, %c0_4] : memref<1x128xf32, #tpu.memory_space<vmem>>, vector<1x128xf32>
    %4 = vector.broadcast %3 : vector<1x128xf32> to vector<8x128xf32>
    %5 = arith.addf %2, %4 : vector<8x128xf32>
    %6 = math.tanh %5 : vector<8x128xf32>
    %c0_5 = arith.constant 0 : index
    %c0_6 = arith.constant 0 : index
    %7 = vector.load %arg4[%c0_5, %c0_6] : memref<128x128xf32, #tpu.memory_space<vmem>>, vector<128x128xf32>
    %cst_7 = arith.constant dense<0.000000e+00> : vector<8x128xf32>
    %8 = tpu.matmul %6, %7, %cst_7 {dimension_numbers = #tpu.dot_dimension_numbers<[1], [0], [0], [1], [0, 0, 1, 1], [], []>} : vector<8x128xf32>, vector<128x128xf32>, vector<8x128xf32> -> vector<8x128xf32>
    %c0_8 = arith.constant 0 : index
    %c0_9 = arith.constant 0 : index
    %9 = vector.load %arg5[%c0_8, %c0_9] : memref<1x128xf32, #tpu.memory_space<vmem>>, vector<1x128xf32>
    %10 = vector.broadcast %9 : vector<1x128xf32> to vector<8x128xf32>
    %11 = arith.addf %8, %10 : vector<8x128xf32>
    %cst_10 = arith.constant 0.000000e+00 : f32
    %12 = vector.broadcast %cst_10 : f32 to vector<8x128xf32>
    %13 = arith.maximumf %11, %12 : vector<8x128xf32>
    %c0_11 = arith.constant 0 : index
    %c0_12 = arith.constant 0 : index
    %14 = vector.load %arg6[%c0_11, %c0_12] : memref<1x128xf32, #tpu.memory_space<vmem>>, vector<1x128xf32>
    %15 = vector.broadcast %14 : vector<1x128xf32> to vector<8x128xf32>
    %16 = arith.mulf %13, %15 : vector<8x128xf32>
    %cst_13 = arith.constant dense<0.000000e+00> : vector<8xf32>
    %17 = vector.multi_reduction <add>, %16, %cst_13 [1] : vector<8x128xf32> to vector<8xf32>
    %18 = vector.shape_cast %17 : vector<8xf32> to vector<8x1xf32>
    %c0_14 = arith.constant 0 : index
    %c0_15 = arith.constant 0 : index
    %19 = vector.load %arg7[%c0_14, %c0_15] : memref<1x1xf32, #tpu.memory_space<vmem>>, vector<1x1xf32>
    %20 = vector.broadcast %19 : vector<1x1xf32> to vector<8x1xf32>
    %21 = arith.addf %18, %20 : vector<8x1xf32>
    %c0_16 = arith.constant 0 : index
    %c0_17 = arith.constant 0 : index
    %22 = vector.load %arg8[%c0_16, %c0_17] : memref<8x1xf32, #tpu.memory_space<vmem>>, vector<8x1xf32>
    tpu.vector_store %arg8[%c0_16, %c0_17], %21 {strides = array<i32>} : memref<8x1xf32, #tpu.memory_space<vmem>>, vector<8x1xf32>,
    return
  }
  func.func @transform_0(%arg0: i32) -> (i32, i32) {
    %c0_i32 = arith.constant 0 : i32
    %c0_i32_0 = arith.constant 0 : i32
    return %arg0, %c0_i32 : i32, i32
  }
  func.func @transform_1(%arg0: i32) -> (i32, i32) {
    %c0_i32 = arith.constant 0 : i32
    %c0_i32_0 = arith.constant 0 : i32
    %c0_i32_1 = arith.constant 0 : i32
    return %c0_i32, %c0_i32_0 : i32, i32
  }
  func.func @transform_2(%arg0: i32) -> (i32, i32) {
    %c0_i32 = arith.constant 0 : i32
    %c0_i32_0 = arith.constant 0 : i32
    %c0_i32_1 = arith.constant 0 : i32
    return %c0_i32, %c0_i32_0 : i32, i32
  }
  func.func @transform_3(%arg0: i32) -> (i32, i32) {
    %c0_i32 = arith.constant 0 : i32
    %c0_i32_0 = arith.constant 0 : i32
    %c0_i32_1 = arith.constant 0 : i32
    return %c0_i32, %c0_i32_0 : i32, i32
  }
  func.func @transform_4(%arg0: i32) -> (i32, i32) {
    %c0_i32 = arith.constant 0 : i32
    %c0_i32_0 = arith.constant 0 : i32
    %c0_i32_1 = arith.constant 0 : i32
    return %c0_i32, %c0_i32_0 : i32, i32
  }
  func.func @transform_5(%arg0: i32) -> (i32, i32) {
    %c0_i32 = arith.constant 0 : i32
    %c0_i32_0 = arith.constant 0 : i32
    %c0_i32_1 = arith.constant 0 : i32
    return %c0_i32, %c0_i32_0 : i32, i32
  }
  func.func @transform_6(%arg0: i32) -> (i32, i32) {
    %c0_i32 = arith.constant 0 : i32
    %c0_i32_0 = arith.constant 0 : i32
    %c0_i32_1 = arith.constant 0 : i32
    return %c0_i32, %c0_i32_0 : i32, i32
  }
  func.func @transform_7(%arg0: i32) -> (i32, i32) {
    %c0_i32 = arith.constant 0 : i32
    %c0_i32_0 = arith.constant 0 : i32
    return %arg0, %c0_i32 : i32, i32
  }
}

module attributes {stable_mosaic.version = 11 : i64} {
  func.func @_fused_mlp_kernel(%arg0: i32, %arg1: memref<8x16xf32, #tpu.memory_space<vmem>>, %arg2: memref<1x128xf32, #tpu.memory_space<vmem>>, %arg3: memref<16x128xf32, #tpu.memory_space<vmem>>, %arg4: memref<128x128xf32, #tpu.memory_space<vmem>>, %arg5: memref<1x128xf32, #tpu.memory_space<vmem>>, %arg6: memref<1x128xf32, #tpu.memory_space<vmem>>, %arg7: memref<1x1xf32, #tpu.memory_space<vmem>>, %arg8: memref<8x1xf32, #tpu.memory_space<vmem>>) attributes {dimension_semantics = [#tpu.dimension_semantics<parallel>], iteration_bounds = array<i64: 1>, scalar_prefetch = 0 : i64, scratch_operands = 0 : i64, tpu.core_type = #tpu.core_type<tc>, window_params = [{transform_indices = @transform_0, window_bounds = array<i64: 8, 16>}, {pipeline_mode = #tpu.pipeline_mode<synchronous>, transform_indices = @transform_1, window_bounds = array<i64: 1, 128>}, {pipeline_mode = #tpu.pipeline_mode<synchronous>, transform_indices = @transform_2, window_bounds = array<i64: 16, 128>}, {pipeline_mode = #tpu.pipeline_mode<synchronous>, transform_indices = @transform_3, window_bounds = array<i64: 128, 128>}, {pipeline_mode = #tpu.pipeline_mode<synchronous>, transform_indices = @transform_4, window_bounds = array<i64: 1, 128>}, {pipeline_mode = #tpu.pipeline_mode<synchronous>, transform_indices = @transform_5, window_bounds = array<i64: 1, 128>}, {pipeline_mode = #tpu.pipeline_mode<synchronous>, transform_indices = @transform_6, window_bounds = array<i64: 1, 1>}, {transform_indices = @transform_7, window_bounds = array<i64: 8, 1>}]} {
    %c0 = arith.constant 0 : index
    %c0_0 = arith.constant 0 : index
    %0 = vector.load %arg1[%c0, %c0_0] : memref<8x16xf32, #tpu.memory_space<vmem>>, vector<8x16xf32>
    %c0_1 = arith.constant 0 : index
    %c0_2 = arith.constant 0 : index
    %1 = vector.load %arg3[%c0_1, %c0_2] : memref<16x128xf32, #tpu.memory_space<vmem>>, vector<16x128xf32>
    %cst = arith.constant dense<0.000000e+00> : vector<8x128xf32>
    %2 = tpu.matmul %0, %1, %cst {dimension_numbers = #tpu.dot_dimension_numbers<[1], [0], [0], [1], [0, 0, 1, 1], [], []>} : vector<8x16xf32>, vector<16x128xf32>, vector<8x128xf32> -> vector<8x128xf32>
    %c0_3 = arith.constant 0 : index
    %c0_4 = arith.constant 0 : index
    %3 = vector.load %arg2[%c0_3, %c0_4] : memref<1x128xf32, #tpu.memory_space<vmem>>, vector<1x128xf32>
    %4 = vector.broadcast %3 : vector<1x128xf32> to vector<8x128xf32>
    %5 = arith.addf %2, %4 : vector<8x128xf32>
    %6 = math.tanh %5 : vector<8x128xf32>
    %c0_5 = arith.constant 0 : index
    %c0_6 = arith.constant 0 : index
    %7 = vector.load %arg4[%c0_5, %c0_6] : memref<128x128xf32, #tpu.memory_space<vmem>>, vector<128x128xf32>
    %cst_7 = arith.constant dense<0.000000e+00> : vector<8x128xf32>
    %8 = tpu.matmul %6, %7, %cst_7 {dimension_numbers = #tpu.dot_dimension_numbers<[1], [0], [0], [1], [0, 0, 1, 1], [], []>} : vector<8x128xf32>, vector<128x128xf32>, vector<8x128xf32> -> vector<8x128xf32>
    %c0_8 = arith.constant 0 : index
    %c0_9 = arith.constant 0 : index
    %9 = vector.load %arg5[%c0_8, %c0_9] : memref<1x128xf32, #tpu.memory_space<vmem>>, vector<1x128xf32>
    %10 = vector.broadcast %9 : vector<1x128xf32> to vector<8x128xf32>
    %11 = arith.addf %8, %10 : vector<8x128xf32>
    %cst_10 = arith.constant 0.000000e+00 : f32
    %12 = vector.broadcast %cst_10 : f32 to vector<8x128xf32>
    %13 = arith.maximumf %11, %12 : vector<8x128xf32>
    %c0_11 = arith.constant 0 : index
    %c0_12 = arith.constant 0 : index
    %14 = vector.load %arg6[%c0_11, %c0_12] : memref<1x128xf32, #tpu.memory_space<vmem>>, vector<1x128xf32>
    %15 = vector.broadcast %14 : vector<1x128xf32> to vector<8x128xf32>
    %16 = arith.mulf %13, %15 : vector<8x128xf32>
    %cst_13 = arith.constant dense<0.000000e+00> : vector<8xf32>
    %17 = vector.multi_reduction <add>, %16, %cst_13 [1] : vector<8x128xf32> to vector<8xf32>
    %18 = vector.shape_cast %17 : vector<8xf32> to vector<8x1xf32>
    %c0_14 = arith.constant 0 : index
    %c0_15 = arith.constant 0 : index
    %19 = vector.load %arg7[%c0_14, %c0_15] : memref<1x1xf32, #tpu.memory_space<vmem>>, vector<1x1xf32>
    %20 = vector.broadcast %19 : vector<1x1xf32> to vector<8x1xf32>
    %21 = arith.addf %18, %20 : vector<8x1xf32>
    %c0_16 = arith.constant 0 : index
    %c0_17 = arith.constant 0 : index
    %22 = vector.load %arg8[%c0_16, %c0_17] : memref<8x1xf32, #tpu.memory_space<vmem>>, vector<8x1xf32>
    tpu.vector_store %arg8[%c0_16, %c0_17], %21 {strides = array<i32>} : memref<8x1xf32, #tpu.memory_space<vmem>>, vector<8x1xf32>,
    return
  }
  func.func @transform_0(%arg0: i32) -> (i32, i32) {
    %c0_i32 = arith.constant 0 : i32
    %c0_i32_0 = arith.constant 0 : i32
    return %arg0, %c0_i32 : i32, i32
  }
  func.func @transform_1(%arg0: i32) -> (i32, i32) {
    %c0_i32 = arith.constant 0 : i32
    %c0_i32_0 = arith.constant 0 : i32
    %c0_i32_1 = arith.constant 0 : i32
    return %c0_i32, %c0_i32_0 : i32, i32
  }
  func.func @transform_2(%arg0: i32) -> (i32, i32) {
    %c0_i32 = arith.constant 0 : i32
    %c0_i32_0 = arith.constant 0 : i32
    %c0_i32_1 = arith.constant 0 : i32
    return %c0_i32, %c0_i32_0 : i32, i32
  }
  func.func @transform_3(%arg0: i32) -> (i32, i32) {
    %c0_i32 = arith.constant 0 : i32
    %c0_i32_0 = arith.constant 0 : i32
    %c0_i32_1 = arith.constant 0 : i32
    return %c0_i32, %c0_i32_0 : i32, i32
  }
  func.func @transform_4(%arg0: i32) -> (i32, i32) {
    %c0_i32 = arith.constant 0 : i32
    %c0_i32_0 = arith.constant 0 : i32
    %c0_i32_1 = arith.constant 0 : i32
    return %c0_i32, %c0_i32_0 : i32, i32
  }
  func.func @transform_5(%arg0: i32) -> (i32, i32) {
    %c0_i32 = arith.constant 0 : i32
    %c0_i32_0 = arith.constant 0 : i32
    %c0_i32_1 = arith.constant 0 : i32
    return %c0_i32, %c0_i32_0 : i32, i32
  }
  func.func @transform_6(%arg0: i32) -> (i32, i32) {
    %c0_i32 = arith.constant 0 : i32
    %c0_i32_0 = arith.constant 0 : i32
    %c0_i32_1 = arith.constant 0 : i32
    return %c0_i32, %c0_i32_0 : i32, i32
  }
  func.func @transform_7(%arg0: i32) -> (i32, i32) {
    %c0_i32 = arith.constant 0 : i32
    %c0_i32_0 = arith.constant 0 : i32
    return %arg0, %c0_i32 : i32, i32
  }
}

</mosaic_0001>

<llo_original>
// kernel: tpu_custom_call.1
$region0: #{tpu_custom_call.1}
  #allocation0 [shape = 'u32[]', space=smem, size = 0x4, offset = 0x4, fixed_abs, tag = 'smem constant byte address 0x4 - core index']
  #allocation1 [shape = 'u32[144,128]{1,0:T(1,128)}', space=vmem, size = 0x12000, scoped, tag = 'internal scratch']
  #allocation2 [shape = 'f32[1,1]{1,0:T(1,128)S(1)}', space=vmem, size = 0x200, scoped, tag = 'scoped memory for tpu_custom_call.1']
  %s0 = inlined_call_operand.vmem [shape: f32[2,16], index: 0, kind: input, shape index: {}]
  %s1 = inlined_call_operand.vmem [shape: f32[1,128], index: 1, kind: input, shape index: {}]
  %s2 = inlined_call_operand.hbm [shape: f32[16,128], index: 2, kind: input, shape index: {}]
  %s3 = inlined_call_operand.hbm [shape: f32[128,128], index: 3, kind: input, shape index: {}]
  %s4 = inlined_call_operand.vmem [shape: f32[1,128], index: 4, kind: input, shape index: {}]
  %s5 = inlined_call_operand.vmem [shape: f32[1,128], index: 5, kind: input, shape index: {}]
  %s6 = inlined_call_operand.<no memory space> [shape: f32[1,1], index: 6, kind: input, shape index: {}]
  %s7 = inlined_call_operand.vmem [shape: f32[2,1], index: 7, kind: output, shape index: {}]
  %s8 = sld [smem:[#allocation0]]
  $region76: #{tpu_custom_call.1} parent=0
    _
  %s10 = ssub.s32 1, %s8
  %s11 = scalar_select 0, %s10, %s8
  %v12 = vstv %s6
  %13 = vst [vmem:[#allocation2] sm:$0x1] %v12
  $region1: #{tpu_custom_call.1} parent=0
    #allocation3 [shape = 'u8[8192]{0}', space=vmem, size = 0x2000, scoped, tag = 'input window, operand 2, single buffered']
    #allocation4 [shape = 's32[1]{0}', space=sflag, size = 0x4, scoped, tag = 'scoped memory for tpu_custom_call.1']
    #allocation5 [shape = 'u8[65536]{0}', space=vmem, size = 0x10000, scoped, tag = 'input window, operand 3, single buffered']
    #allocation6 [shape = 's32[1]{0}', space=sflag, size = 0x4, scoped, tag = 'scoped memory for tpu_custom_call.1']
    #allocation7 [shape = 'u8[4096]{0}', space=vmem, size = 0x1000, scoped, tag = 'output window, operand 0, single buffered']
    %14 = vsyncpa [#allocation4], 0
    %15 = vsyncpa [#allocation6], 0
    // Predicated region
    $region2: #{tpu_custom_call.1} parent=1 // pred_check
      _
    $region3: #{tpu_custom_call.1} parent=1 // pred_check_branch
      %17 = sbr.rel (0) target = $region5
    $region4: #{tpu_custom_call.1} parent=1 // pred_region
      _
    $region5: #{tpu_custom_call.1} parent=1 // pred_fallthru
      _
    // Predicated region
    $region6: #{tpu_custom_call.1} parent=1 // pred_check
      _
    $region7: #{tpu_custom_call.1} parent=1 // pred_check_branch
      %19 = sbr.rel (0) target = $region9
    $region8: #{tpu_custom_call.1} parent=1 // pred_region
      _
    $region9: #{tpu_custom_call.1} parent=1 // pred_fallthru
      _
    // Predicated region
    $region10: #{tpu_custom_call.1} parent=1 // pred_check
      _
    $region11: #{tpu_custom_call.1} parent=1 // pred_check_branch
      %21 = sbr.rel (0) target = $region13
    $region12: #{tpu_custom_call.1} parent=1 // pred_region
      %s23 = ssub.s32 256, 256
      %24 = vsyncadd [#allocation4], %s23
      %s25 = sshll.u32 [#allocation3], 4
      %s26 = int_to_ptr.vmem [resolvable:$true] %s25
      %31 = dma.hbm_to_vmem [thread:$0]  %s2, 256, %s26, [#allocation4], 128, 128, 8
    $region13: #{tpu_custom_call.1} parent=1 // pred_fallthru
      _
    // Predicated region
    $region14: #{tpu_custom_call.1} parent=1 // pred_check
      _
    $region15: #{tpu_custom_call.1} parent=1 // pred_check_branch
      %33 = sbr.rel (0) target = $region17
    $region16: #{tpu_custom_call.1} parent=1 // pred_region
      %s35 = ssub.s32 2048, 2048
      %36 = vsyncadd [#allocation6], %s35
      %s37 = sshll.u32 [#allocation5], 4
      %s38 = int_to_ptr.vmem [resolvable:$true] %s37
      %43 = dma.hbm_to_vmem [thread:$0]  %s3, 2048, %s38, [#allocation6], 128, 128, 8
    $region17: #{tpu_custom_call.1} parent=1 // pred_fallthru
      _
    // Predicated region
    $region18: #{tpu_custom_call.1} parent=1 // pred_check
      _
    $region19: #{tpu_custom_call.1} parent=1 // pred_check_branch
      %45 = sbr.rel (0) target = $region21
    $region20: #{tpu_custom_call.1} parent=1 // pred_region
      _
    $region21: #{tpu_custom_call.1} parent=1 // pred_fallthru
      _
    // Predicated region
    $region22: #{tpu_custom_call.1} parent=1 // pred_check
      _
    $region23: #{tpu_custom_call.1} parent=1 // pred_check_branch
      %47 = sbr.rel (0) target = $region25
    $region24: #{tpu_custom_call.1} parent=1 // pred_region
      _
    $region25: #{tpu_custom_call.1} parent=1 // pred_fallthru
      _
    // Predicated region
    $region26: #{tpu_custom_call.1} parent=1 // pred_check
      _
    $region27: #{tpu_custom_call.1} parent=1 // pred_check_branch
      %49 = sbr.rel (0) target = $region29
    $region28: #{tpu_custom_call.1} parent=1 // pred_region
      _
    $region29: #{tpu_custom_call.1} parent=1 // pred_fallthru
      _
    // Predicated region
    $region30: #{tpu_custom_call.1} parent=1 // pred_check
      _
    $region31: #{tpu_custom_call.1} parent=1 // pred_check_branch
      %51 = sbr.rel (0) target = $region33
    $region32: #{tpu_custom_call.1} parent=1 // pred_region
      %52 = dma.done [#allocation4], 256
    $region33: #{tpu_custom_call.1} parent=1 // pred_fallthru
      _
    // Predicated region
    $region34: #{tpu_custom_call.1} parent=1 // pred_check
      _
    $region35: #{tpu_custom_call.1} parent=1 // pred_check_branch
      %54 = sbr.rel (0) target = $region37
    $region36: #{tpu_custom_call.1} parent=1 // pred_region
      %55 = dma.done [#allocation6], 2048
    $region37: #{tpu_custom_call.1} parent=1 // pred_fallthru
      _
    %v56 = vld [vmem:[%s0] sm:$0xff]
    %v57 = vld [vmem:[#allocation3] sm:$0xff]
    %v58 = vld [vmem:[#allocation3 + $0x8] sm:$0xff]
    %v59 = vld [vmem:[%s1] sm:$0x1]
    %v61 = vlaneseq
    %v62 = vshrl.u32 %v61, 7
    %v63 = vsub.s32 0, %v62
    %v64 = vrot.slane %v59, %v63
    %vm66 = vcmask 130048
    %v68 = vsel %vm66, %v56, 0
    %70 = vmatprep.subr.mxu0 0.0
    %71 = vmatpush1.msra.mxu0 %v57
    %72 = vmatprep.subr.mxu0 0.0
    %73 = vmatpush1.msra.mxu0 %v58
    %74 = vmatprep.subr.mxu0 0.0
    %75 = vmatpush1.msra.mxu0 0.0
    %76 = vmatprep.subr.mxu0 0.0
    %77 = vmatpush1.msra.mxu0 0.0
    %78 = vmatprep.subr.mxu0 0.0
    %79 = vmatpush1.msra.mxu0 0.0
    %80 = vmatprep.subr.mxu0 0.0
    %81 = vmatpush1.msra.mxu0 0.0
    %82 = vmatprep.subr.mxu0 0.0
    %83 = vmatpush1.msra.mxu0 0.0
    %84 = vmatprep.subr.mxu0 0.0
    %85 = vmatpush1.msra.mxu0 0.0
    %86 = vmatprep.subr.mxu0 0.0
    %87 = vmatpush1.msra.mxu0 0.0
    %88 = vmatprep.subr.mxu0 0.0
    %89 = vmatpush1.msra.mxu0 0.0
    %90 = vmatprep.subr.mxu0 0.0
    %91 = vmatpush1.msra.mxu0 0.0
    %92 = vmatprep.subr.mxu0 0.0
    %93 = vmatpush1.msra.mxu0 0.0
    %94 = vmatprep.subr.mxu0 0.0
    %95 = vmatpush1.msra.mxu0 0.0
    %96 = vmatprep.subr.mxu0 0.0
    %97 = vmatpush1.msra.mxu0 0.0
    %98 = vmatprep.subr.mxu0 0.0
    %99 = vmatpush1.msra.mxu0 0.0
    %100 = vmatprep.subr.mxu0 0.0
    %101 = vmatpush1.msra.mxu0 0.0
    %102 = vmatprep.subr.mxu0 0.0
    %103 = vmatpush1.msra.mxu0 0.0
    %104 = vmatprep.subr.mxu0 0.0
    %105 = vmatpush1.msra.mxu0 0.0
    %106 = vmatprep.subr.mxu0 0.0
    %107 = vmatpush1.msra.mxu0 0.0
    %108 = vmatprep.subr.mxu0 0.0
    %109 = vmatpush1.msra.mxu0 0.0
    %110 = vmatprep.subr.mxu0 0.0
    %111 = vmatpush1.msra.mxu0 0.0
    %112 = vmatprep.subr.mxu0 0.0
    %113 = vmatpush1.msra.mxu0 0.0
    %114 = vmatprep.subr.mxu0 0.0
    %115 = vmatpush1.msra.mxu0 0.0
    %116 = vmatprep.subr.mxu0 0.0
    %117 = vmatpush1.msra.mxu0 0.0
    %118 = vmatprep.subr.mxu0 0.0
    %119 = vmatpush1.msra.mxu0 0.0
    %120 = vmatprep.subr.mxu0 0.0
    %121 = vmatpush1.msra.mxu0 0.0
    %122 = vmatprep.subr.mxu0 0.0
    %123 = vmatpush1.msra.mxu0 0.0
    %124 = vmatprep.subr.mxu0 0.0
    %125 = vmatpush1.msra.mxu0 0.0
    %126 = vmatprep.subr.mxu0 0.0
    %127 = vmatpush1.msra.mxu0 0.0
    %128 = vmatprep.subr.mxu0 0.0
    %129 = vmatpush1.msra.mxu0 0.0
    %130 = vmatprep.subr.mxu0 0.0
    %131 = vmatpush1.msra.mxu0 0.0
    %132 = vmatprep.subr.mxu0 0.0
    %133 = vmatpush1.msra.mxu0 0.0
    %134 = vmatprep.mubr.f32.mxu0 0.0
    %135 = vmatmul.mubr.f32.gmra.mrb[0].mxu0 %v68
    %v136 = vpop.f32.mrb[0].mxu0
    %v137 = vadd.f32 %v64, %v136
    %v138 = vpop.f32.mrb[0].mxu0
    %139 = vdwg.mxu0
    %v140 = vtanh.pop %v137
    %v141 = vld [vmem:[#allocation5] sm:$0xff]
    %v142 = vld [vmem:[#allocation5 + $0x8] sm:$0xff]
    %v143 = vld [vmem:[#allocation5 + $0x10] sm:$0xff]
    %v144 = vld [vmem:[#allocation5 + $0x18] sm:$0xff]
    %v145 = vld [vmem:[#allocation5 + $0x20] sm:$0xff]
    %v146 = vld [vmem:[#allocation5 + $0x28] sm:$0xff]
    %v147 = vld [vmem:[#allocation5 + $0x30] sm:$0xff]
    %v148 = vld [vmem:[#allocation5 + $0x38] sm:$0xff]
    %v149 = vld [vmem:[#allocation5 + $0x40] sm:$0xff]
    %v150 = vld [vmem:[#allocation5 + $0x48] sm:$0xff]
    %v151 = vld [vmem:[#allocation5 + $0x50] sm:$0xff]
    %v152 = vld [vmem:[#allocation5 + $0x58] sm:$0xff]
    %v153 = vld [vmem:[#allocation5 + $0x60] sm:$0xff]
    %v154 = vld [vmem:[#allocation5 + $0x68] sm:$0xff]
    %v155 = vld [vmem:[#allocation5 + $0x70] sm:$0xff]
    %v156 = vld [vmem:[#allocation5 + $0x78] sm:$0xff]
    %v157 = vld [vmem:[%s4] sm:$0x1]
    %v159 = vlaneseq
    %v160 = vshrl.u32 %v159, 7
    %v161 = vsub.s32 0, %v160
    %v162 = vrot.slane %v157, %v161
    %164 = vmatprep.subr.mxu0 0.0
    %165 = vmatpush1.msra.mxu0 %v141
    %166 = vmatprep.subr.mxu0 0.0
    %167 = vmatpush1.msra.mxu0 %v142
    %168 = vmatprep.subr.mxu0 0.0
    %169 = vmatpush1.msra.mxu0 %v143
    %170 = vmatprep.subr.mxu0 0.0
    %171 = vmatpush1.msra.mxu0 %v144
    %172 = vmatprep.subr.mxu0 0.0
    %173 = vmatpush1.msra.mxu0 %v145
    %174 = vmatprep.subr.mxu0 0.0
    %175 = vmatpush1.msra.mxu0 %v146
    %176 = vmatprep.subr.mxu0 0.0
    %177 = vmatpush1.msra.mxu0 %v147
    %178 = vmatprep.subr.mxu0 0.0
    %179 = vmatpush1.msra.mxu0 %v148
    %180 = vmatprep.subr.mxu0 0.0
    %181 = vmatpush1.msra.mxu0 %v149
    %182 = vmatprep.subr.mxu0 0.0
    %183 = vmatpush1.msra.mxu0 %v150
    %184 = vmatprep.subr.mxu0 0.0
    %185 = vmatpush1.msra.mxu0 %v151
    %186 = vmatprep.subr.mxu0 0.0
    %187 = vmatpush1.msra.mxu0 %v152
    %188 = vmatprep.subr.mxu0 0.0
    %189 = vmatpush1.msra.mxu0 %v153
    %190 = vmatprep.subr.mxu0 0.0
    %191 = vmatpush1.msra.mxu0 %v154
    %192 = vmatprep.subr.mxu0 0.0
    %193 = vmatpush1.msra.mxu0 %v155
    %194 = vmatprep.subr.mxu0 0.0
    %195 = vmatpush1.msra.mxu0 %v156
    %196 = vmatprep.subr.mxu0 0.0
    %197 = vmatpush1.msra.mxu0 0.0
    %198 = vmatprep.subr.mxu0 0.0
    %199 = vmatpush1.msra.mxu0 0.0
    %200 = vmatprep.subr.mxu0 0.0
    %201 = vmatpush1.msra.mxu0 0.0
    %202 = vmatprep.subr.mxu0 0.0
    %203 = vmatpush1.msra.mxu0 0.0
    %204 = vmatprep.subr.mxu0 0.0
    %205 = vmatpush1.msra.mxu0 0.0
    %206 = vmatprep.subr.mxu0 0.0
    %207 = vmatpush1.msra.mxu0 0.0
    %208 = vmatprep.subr.mxu0 0.0
    %209 = vmatpush1.msra.mxu0 0.0
    %210 = vmatprep.subr.mxu0 0.0
    %211 = vmatpush1.msra.mxu0 0.0
    %212 = vmatprep.subr.mxu0 0.0
    %213 = vmatpush1.msra.mxu0 0.0
    %214 = vmatprep.subr.mxu0 0.0
    %215 = vmatpush1.msra.mxu0 0.0
    %216 = vmatprep.subr.mxu0 0.0
    %217 = vmatpush1.msra.mxu0 0.0
    %218 = vmatprep.subr.mxu0 0.0
    %219 = vmatpush1.msra.mxu0 0.0
    %220 = vmatprep.subr.mxu0 0.0
    %221 = vmatpush1.msra.mxu0 0.0
    %222 = vmatprep.subr.mxu0 0.0
    %223 = vmatpush1.msra.mxu0 0.0
    %224 = vmatprep.subr.mxu0 0.0
    %225 = vmatpush1.msra.mxu0 0.0
    %226 = vmatprep.subr.mxu0 0.0
    %227 = vmatpush1.msra.mxu0 0.0
    %228 = vmatprep.mubr.f32.mxu0 0.0
    %229 = vmatmul.mubr.f32.gmra.mrb[0].mxu0 %v140
    %v230 = vpop.f32.mrb[0].mxu0
    %v231 = vadd.f32 %v162, %v230
    %v232 = vpop.f32.mrb[0].mxu0
    %233 = vdwg.mxu0
    %v234 = vmax.f32 %v231, 0.0
    %v235 = vld [vmem:[%s5] sm:$0x1]
    %v237 = vlaneseq
    %v238 = vshrl.u32 %v237, 7
    %v239 = vsub.s32 0, %v238
    %v240 = vrot.slane %v235, %v239
    %v242 = vmul.f32 %v234, %v240
    %243 = vadd.xlane.f32.xlu0 %v242
    %v244 = vpop.xlane.xlu0 %243
    %v245 = vld [vmem:[#allocation2] sm:$0x1]
    %v247 = vlaneseq
    %v248 = vshrl.u32 %v247, 7
    %v249 = vsub.s32 0, %v248
    %v250 = vrot.slane %v245, %v249
    %v252 = vadd.f32 %v244, %v250
    %vm253 = vcmask 7168
    %254 = vst.msk [vmem:[#allocation7] sm:$0xff] %vm253, %v252
    // Predicated region
    $region38: #{tpu_custom_call.1} parent=1 // pred_check
      _
    $region39: #{tpu_custom_call.1} parent=1 // pred_check_branch
      %256 = sbr.rel (0) target = $region41
    $region40: #{tpu_custom_call.1} parent=1 // pred_region
      // Predicated region
      $region42: #{tpu_custom_call.1} parent=40 // pred_check
        _
      $region43: #{tpu_custom_call.1} parent=40 // pred_check_branch
        %258 = sbr.rel (0) target = $region45
      $region44: #{tpu_custom_call.1} parent=40 // pred_region
        // Predicated region
        $region46: #{tpu_custom_call.1} parent=44 // pred_check
          _
        $region47: #{tpu_custom_call.1} parent=44 // pred_check_branch
          %260 = sbr.rel target = $region49
        $region48: #{tpu_custom_call.1} parent=44 // pred_region
          // Predicated region
          $region61: #{tpu_custom_call.1} parent=48 // pred_check
            _
          $region62: #{tpu_custom_call.1} parent=48 // pred_check_branch
            %275 = sbr.rel (0) target = $region64
          $region63: #{tpu_custom_call.1} parent=48 // pred_region
            loop: start=0, step=1, limit=1
            $region65: #{tpu_custom_call.1} parent=63 // loop_pre_header
              _
            $region66: #{tpu_custom_call.1} parent=63 // loop_header
              %s278 = sphi 0, %s282
              %p279 = scmp.ge.s32.totalorder %s278, 1
              %s283 = sphi [#allocation7], [#allocation7]
              %s284 = sphi %s7, %s7
            $region67: #{tpu_custom_call.1} parent=63 // loop_header_branch
              %281 = sbr.rel (%p279) target = $region71
            $region68: #{tpu_custom_call.1} parent=63 // loop_body
              %v285 = vld [vmem:[%s283] sm:$0x3]
              %286 = vst [vmem:[%s284] sm:$0x3] %v285
            $region69: #{tpu_custom_call.1} parent=63 // loop_footer
              %s282 = sadd.s32 1, %s278
            $region70: #{tpu_custom_call.1} parent=63 // loop_footer_branch
              %277 = sbr.rel target = $region66
            $region71: #{tpu_custom_call.1} parent=63 // loop_exit
              _
          $region64: #{tpu_custom_call.1} parent=48 // pred_fallthru
            _
        $region49: #{tpu_custom_call.1} parent=44 // pred_fallthru
          _
        // Predicated region
        $region50: #{tpu_custom_call.1} parent=44 // pred_check
          _
        $region51: #{tpu_custom_call.1} parent=44 // pred_check_branch
          %262 = sbr.rel (0) target = $region53
        $region52: #{tpu_custom_call.1} parent=44 // pred_region
          loop: start=0, step=1, limit=1
          $region54: #{tpu_custom_call.1} parent=52 // loop_pre_header
            _
          $region55: #{tpu_custom_call.1} parent=52 // loop_header
            %s265 = sphi 0, %s269
            %p266 = scmp.ge.s32.totalorder %s265, 1
            %s270 = sphi [#allocation7], [#allocation7]
            %s271 = sphi %s7, %s7
          $region56: #{tpu_custom_call.1} parent=52 // loop_header_branch
            %268 = sbr.rel (%p266) target = $region60
          $region57: #{tpu_custom_call.1} parent=52 // loop_body
            %v272 = vld [vmem:[%s270] sm:$0x3]
            %273 = vst [vmem:[%s271] sm:$0x3] %v272
          $region58: #{tpu_custom_call.1} parent=52 // loop_footer
            %s269 = sadd.s32 1, %s265
          $region59: #{tpu_custom_call.1} parent=52 // loop_footer_branch
            %264 = sbr.rel target = $region55
          $region60: #{tpu_custom_call.1} parent=52 // loop_exit
            _
        $region53: #{tpu_custom_call.1} parent=44 // pred_fallthru
          _
      $region45: #{tpu_custom_call.1} parent=40 // pred_fallthru
        _
      %287 = vnop
    $region41: #{tpu_custom_call.1} parent=1 // pred_fallthru
      _
    // Predicated region
    $region72: #{tpu_custom_call.1} parent=1 // pred_check
      _
    $region73: #{tpu_custom_call.1} parent=1 // pred_check_branch
      %289 = sbr.rel (0) target = $region75
    $region74: #{tpu_custom_call.1} parent=1 // pred_region
      _
    $region75: #{tpu_custom_call.1} parent=1 // pred_fallthru
      _
    %290 = vsyncpa [#allocation4], 1
    %291 = vsyncpa [#allocation6], 1

// kernel: tpu_custom_call.1
$region0: #{tpu_custom_call.1}
  #allocation0 [shape = 'u32[]', space=smem, size = 0x4, offset = 0x4, fixed_abs, tag = 'smem constant byte address 0x4 - core index']
  #allocation1 [shape = 'u32[144,128]{1,0:T(1,128)}', space=vmem, size = 0x12000, scoped, tag = 'internal scratch']
  #allocation2 [shape = 'f32[1,1]{1,0:T(1,128)S(1)}', space=vmem, size = 0x200, scoped, tag = 'scoped memory for tpu_custom_call.1']
  %s0 = inlined_call_operand.vmem [shape: f32[2,16], index: 0, kind: input, shape index: {}]
  %s1 = inlined_call_operand.vmem [shape: f32[1,128], index: 1, kind: input, shape index: {}]
  %s2 = inlined_call_operand.hbm [shape: f32[16,128], index: 2, kind: input, shape index: {}]
  %s3 = inlined_call_operand.hbm [shape: f32[128,128], index: 3, kind: input, shape index: {}]
  %s4 = inlined_call_operand.vmem [shape: f32[1,128], index: 4, kind: input, shape index: {}]
  %s5 = inlined_call_operand.vmem [shape: f32[1,128], index: 5, kind: input, shape index: {}]
  %s6 = inlined_call_operand.<no memory space> [shape: f32[1,1], index: 6, kind: input, shape index: {}]
  %s7 = inlined_call_operand.vmem [shape: f32[2,1], index: 7, kind: output, shape index: {}]
  %s8 = sld [smem:[#allocation0]]
  $region76: #{tpu_custom_call.1} parent=0
    _
  %s10 = ssub.s32 1, %s8
  %s11 = scalar_select 0, %s10, %s8
  %v12 = vstv %s6
  %13 = vst [vmem:[#allocation2] sm:$0x1] %v12
  $region1: #{tpu_custom_call.1} parent=0
    #allocation3 [shape = 'u8[8192]{0}', space=vmem, size = 0x2000, scoped, tag = 'input window, operand 2, single buffered']
    #allocation4 [shape = 's32[1]{0}', space=sflag, size = 0x4, scoped, tag = 'scoped memory for tpu_custom_call.1']
    #allocation5 [shape = 'u8[65536]{0}', space=vmem, size = 0x10000, scoped, tag = 'input window, operand 3, single buffered']
    #allocation6 [shape = 's32[1]{0}', space=sflag, size = 0x4, scoped, tag = 'scoped memory for tpu_custom_call.1']
    #allocation7 [shape = 'u8[4096]{0}', space=vmem, size = 0x1000, scoped, tag = 'output window, operand 0, single buffered']
    %14 = vsyncpa [#allocation4], 0
    %15 = vsyncpa [#allocation6], 0
    // Predicated region
    $region2: #{tpu_custom_call.1} parent=1 // pred_check
      _
    $region3: #{tpu_custom_call.1} parent=1 // pred_check_branch
      %17 = sbr.rel (0) target = $region5
    $region4: #{tpu_custom_call.1} parent=1 // pred_region
      _
    $region5: #{tpu_custom_call.1} parent=1 // pred_fallthru
      _
    // Predicated region
    $region6: #{tpu_custom_call.1} parent=1 // pred_check
      _
    $region7: #{tpu_custom_call.1} parent=1 // pred_check_branch
      %19 = sbr.rel (0) target = $region9
    $region8: #{tpu_custom_call.1} parent=1 // pred_region
      _
    $region9: #{tpu_custom_call.1} parent=1 // pred_fallthru
      _
    // Predicated region
    $region10: #{tpu_custom_call.1} parent=1 // pred_check
      _
    $region11: #{tpu_custom_call.1} parent=1 // pred_check_branch
      %21 = sbr.rel (0) target = $region13
    $region12: #{tpu_custom_call.1} parent=1 // pred_region
      %s23 = ssub.s32 256, 256
      %24 = vsyncadd [#allocation4], %s23
      %s25 = sshll.u32 [#allocation3], 4
      %s26 = int_to_ptr.vmem [resolvable:$true] %s25
      %31 = dma.hbm_to_vmem [thread:$0]  %s2, 256, %s26, [#allocation4], 128, 128, 8
    $region13: #{tpu_custom_call.1} parent=1 // pred_fallthru
      _
    // Predicated region
    $region14: #{tpu_custom_call.1} parent=1 // pred_check
      _
    $region15: #{tpu_custom_call.1} parent=1 // pred_check_branch
      %33 = sbr.rel (0) target = $region17
    $region16: #{tpu_custom_call.1} parent=1 // pred_region
      %s35 = ssub.s32 2048, 2048
      %36 = vsyncadd [#allocation6], %s35
      %s37 = sshll.u32 [#allocation5], 4
      %s38 = int_to_ptr.vmem [resolvable:$true] %s37
      %43 = dma.hbm_to_vmem [thread:$0]  %s3, 2048, %s38, [#allocation6], 128, 128, 8
    $region17: #{tpu_custom_call.1} parent=1 // pred_fallthru
      _
    // Predicated region
    $region18: #{tpu_custom_call.1} parent=1 // pred_check
      _
    $region19: #{tpu_custom_call.1} parent=1 // pred_check_branch
      %45 = sbr.rel (0) target = $region21
    $region20: #{tpu_custom_call.1} parent=1 // pred_region
      _
    $region21: #{tpu_custom_call.1} parent=1 // pred_fallthru
      _
    // Predicated region
    $region22: #{tpu_custom_call.1} parent=1 // pred_check
      _
    $region23: #{tpu_custom_call.1} parent=1 // pred_check_branch
      %47 = sbr.rel (0) target = $region25
    $region24: #{tpu_custom_call.1} parent=1 // pred_region
      _
    $region25: #{tpu_custom_call.1} parent=1 // pred_fallthru
      _
    // Predicated region
    $region26: #{tpu_custom_call.1} parent=1 // pred_check
      _
    $region27: #{tpu_custom_call.1} parent=1 // pred_check_branch
      %49 = sbr.rel (0) target = $region29
    $region28: #{tpu_custom_call.1} parent=1 // pred_region
      _
    $region29: #{tpu_custom_call.1} parent=1 // pred_fallthru
      _
    // Predicated region
    $region30: #{tpu_custom_call.1} parent=1 // pred_check
      _
    $region31: #{tpu_custom_call.1} parent=1 // pred_check_branch
      %51 = sbr.rel (0) target = $region33
    $region32: #{tpu_custom_call.1} parent=1 // pred_region
      %52 = dma.done [#allocation4], 256
    $region33: #{tpu_custom_call.1} parent=1 // pred_fallthru
      _
    // Predicated region
    $region34: #{tpu_custom_call.1} parent=1 // pred_check
      _
    $region35: #{tpu_custom_call.1} parent=1 // pred_check_branch
      %54 = sbr.rel (0) target = $region37
    $region36: #{tpu_custom_call.1} parent=1 // pred_region
      %55 = dma.done [#allocation6], 2048
    $region37: #{tpu_custom_call.1} parent=1 // pred_fallthru
      _
    %v56 = vld [vmem:[%s0] sm:$0xff]
    %v57 = vld [vmem:[#allocation3] sm:$0xff]
    %v58 = vld [vmem:[#allocation3 + $0x8] sm:$0xff]
    %v59 = vld [vmem:[%s1] sm:$0x1]
    %v61 = vlaneseq
    %v62 = vshrl.u32 %v61, 7
    %v63 = vsub.s32 0, %v62
    %v64 = vrot.slane %v59, %v63
    %vm66 = vcmask 130048
    %v68 = vsel %vm66, %v56, 0
    %70 = vmatprep.subr.mxu0 0.0
    %71 = vmatpush1.msra.mxu0 %v57
    %72 = vmatprep.subr.mxu0 0.0
    %73 = vmatpush1.msra.mxu0 %v58
    %74 = vmatprep.subr.mxu0 0.0
    %75 = vmatpush1.msra.mxu0 0.0
    %76 = vmatprep.subr.mxu0 0.0
    %77 = vmatpush1.msra.mxu0 0.0
    %78 = vmatprep.subr.mxu0 0.0
    %79 = vmatpush1.msra.mxu0 0.0
    %80 = vmatprep.subr.mxu0 0.0
    %81 = vmatpush1.msra.mxu0 0.0
    %82 = vmatprep.subr.mxu0 0.0
    %83 = vmatpush1.msra.mxu0 0.0
    %84 = vmatprep.subr.mxu0 0.0
    %85 = vmatpush1.msra.mxu0 0.0
    %86 = vmatprep.subr.mxu0 0.0
    %87 = vmatpush1.msra.mxu0 0.0
    %88 = vmatprep.subr.mxu0 0.0
    %89 = vmatpush1.msra.mxu0 0.0
    %90 = vmatprep.subr.mxu0 0.0
    %91 = vmatpush1.msra.mxu0 0.0
    %92 = vmatprep.subr.mxu0 0.0
    %93 = vmatpush1.msra.mxu0 0.0
    %94 = vmatprep.subr.mxu0 0.0
    %95 = vmatpush1.msra.mxu0 0.0
    %96 = vmatprep.subr.mxu0 0.0
    %97 = vmatpush1.msra.mxu0 0.0
    %98 = vmatprep.subr.mxu0 0.0
    %99 = vmatpush1.msra.mxu0 0.0
    %100 = vmatprep.subr.mxu0 0.0
    %101 = vmatpush1.msra.mxu0 0.0
    %102 = vmatprep.subr.mxu0 0.0
    %103 = vmatpush1.msra.mxu0 0.0
    %104 = vmatprep.subr.mxu0 0.0
    %105 = vmatpush1.msra.mxu0 0.0
    %106 = vmatprep.subr.mxu0 0.0
    %107 = vmatpush1.msra.mxu0 0.0
    %108 = vmatprep.subr.mxu0 0.0
    %109 = vmatpush1.msra.mxu0 0.0
    %110 = vmatprep.subr.mxu0 0.0
    %111 = vmatpush1.msra.mxu0 0.0
    %112 = vmatprep.subr.mxu0 0.0
    %113 = vmatpush1.msra.mxu0 0.0
    %114 = vmatprep.subr.mxu0 0.0
    %115 = vmatpush1.msra.mxu0 0.0
    %116 = vmatprep.subr.mxu0 0.0
    %117 = vmatpush1.msra.mxu0 0.0
    %118 = vmatprep.subr.mxu0 0.0
    %119 = vmatpush1.msra.mxu0 0.0
    %120 = vmatprep.subr.mxu0 0.0
    %121 = vmatpush1.msra.mxu0 0.0
    %122 = vmatprep.subr.mxu0 0.0
    %123 = vmatpush1.msra.mxu0 0.0
    %124 = vmatprep.subr.mxu0 0.0
    %125 = vmatpush1.msra.mxu0 0.0
    %126 = vmatprep.subr.mxu0 0.0
    %127 = vmatpush1.msra.mxu0 0.0
    %128 = vmatprep.subr.mxu0 0.0
    %129 = vmatpush1.msra.mxu0 0.0
    %130 = vmatprep.subr.mxu0 0.0
    %131 = vmatpush1.msra.mxu0 0.0
    %132 = vmatprep.subr.mxu0 0.0
    %133 = vmatpush1.msra.mxu0 0.0
    %134 = vmatprep.mubr.f32.mxu0 0.0
    %135 = vmatmul.mubr.f32.gmra.mrb[0].mxu0 %v68
    %v136 = vpop.f32.mrb[0].mxu0
    %v137 = vadd.f32 %v64, %v136
    %v138 = vpop.f32.mrb[0].mxu0
    %139 = vdwg.mxu0
    %v140 = vtanh.pop %v137
    %v141 = vld [vmem:[#allocation5] sm:$0xff]
    %v142 = vld [vmem:[#allocation5 + $0x8] sm:$0xff]
    %v143 = vld [vmem:[#allocation5 + $0x10] sm:$0xff]
    %v144 = vld [vmem:[#allocation5 + $0x18] sm:$0xff]
    %v145 = vld [vmem:[#allocation5 + $0x20] sm:$0xff]
    %v146 = vld [vmem:[#allocation5 + $0x28] sm:$0xff]
    %v147 = vld [vmem:[#allocation5 + $0x30] sm:$0xff]
    %v148 = vld [vmem:[#allocation5 + $0x38] sm:$0xff]
    %v149 = vld [vmem:[#allocation5 + $0x40] sm:$0xff]
    %v150 = vld [vmem:[#allocation5 + $0x48] sm:$0xff]
    %v151 = vld [vmem:[#allocation5 + $0x50] sm:$0xff]
    %v152 = vld [vmem:[#allocation5 + $0x58] sm:$0xff]
    %v153 = vld [vmem:[#allocation5 + $0x60] sm:$0xff]
    %v154 = vld [vmem:[#allocation5 + $0x68] sm:$0xff]
    %v155 = vld [vmem:[#allocation5 + $0x70] sm:$0xff]
    %v156 = vld [vmem:[#allocation5 + $0x78] sm:$0xff]
    %v157 = vld [vmem:[%s4] sm:$0x1]
    %v159 = vlaneseq
    %v160 = vshrl.u32 %v159, 7
    %v161 = vsub.s32 0, %v160
    %v162 = vrot.slane %v157, %v161
    %164 = vmatprep.subr.mxu0 0.0
    %165 = vmatpush1.msra.mxu0 %v141
    %166 = vmatprep.subr.mxu0 0.0
    %167 = vmatpush1.msra.mxu0 %v142
    %168 = vmatprep.subr.mxu0 0.0
    %169 = vmatpush1.msra.mxu0 %v143
    %170 = vmatprep.subr.mxu0 0.0
    %171 = vmatpush1.msra.mxu0 %v144
    %172 = vmatprep.subr.mxu0 0.0
    %173 = vmatpush1.msra.mxu0 %v145
    %174 = vmatprep.subr.mxu0 0.0
    %175 = vmatpush1.msra.mxu0 %v146
    %176 = vmatprep.subr.mxu0 0.0
    %177 = vmatpush1.msra.mxu0 %v147
    %178 = vmatprep.subr.mxu0 0.0
    %179 = vmatpush1.msra.mxu0 %v148
    %180 = vmatprep.subr.mxu0 0.0
    %181 = vmatpush1.msra.mxu0 %v149
    %182 = vmatprep.subr.mxu0 0.0
    %183 = vmatpush1.msra.mxu0 %v150
    %184 = vmatprep.subr.mxu0 0.0
    %185 = vmatpush1.msra.mxu0 %v151
    %186 = vmatprep.subr.mxu0 0.0
    %187 = vmatpush1.msra.mxu0 %v152
    %188 = vmatprep.subr.mxu0 0.0
    %189 = vmatpush1.msra.mxu0 %v153
    %190 = vmatprep.subr.mxu0 0.0
    %191 = vmatpush1.msra.mxu0 %v154
    %192 = vmatprep.subr.mxu0 0.0
    %193 = vmatpush1.msra.mxu0 %v155
    %194 = vmatprep.subr.mxu0 0.0
    %195 = vmatpush1.msra.mxu0 %v156
    %196 = vmatprep.subr.mxu0 0.0
    %197 = vmatpush1.msra.mxu0 0.0
    %198 = vmatprep.subr.mxu0 0.0
    %199 = vmatpush1.msra.mxu0 0.0
    %200 = vmatprep.subr.mxu0 0.0
    %201 = vmatpush1.msra.mxu0 0.0
    %202 = vmatprep.subr.mxu0 0.0
    %203 = vmatpush1.msra.mxu0 0.0
    %204 = vmatprep.subr.mxu0 0.0
    %205 = vmatpush1.msra.mxu0 0.0
    %206 = vmatprep.subr.mxu0 0.0
    %207 = vmatpush1.msra.mxu0 0.0
    %208 = vmatprep.subr.mxu0 0.0
    %209 = vmatpush1.msra.mxu0 0.0
    %210 = vmatprep.subr.mxu0 0.0
    %211 = vmatpush1.msra.mxu0 0.0
    %212 = vmatprep.subr.mxu0 0.0
    %213 = vmatpush1.msra.mxu0 0.0
    %214 = vmatprep.subr.mxu0 0.0
    %215 = vmatpush1.msra.mxu0 0.0
    %216 = vmatprep.subr.mxu0 0.0
    %217 = vmatpush1.msra.mxu0 0.0
    %218 = vmatprep.subr.mxu0 0.0
    %219 = vmatpush1.msra.mxu0 0.0
    %220 = vmatprep.subr.mxu0 0.0
    %221 = vmatpush1.msra.mxu0 0.0
    %222 = vmatprep.subr.mxu0 0.0
    %223 = vmatpush1.msra.mxu0 0.0
    %224 = vmatprep.subr.mxu0 0.0
    %225 = vmatpush1.msra.mxu0 0.0
    %226 = vmatprep.subr.mxu0 0.0
    %227 = vmatpush1.msra.mxu0 0.0
    %228 = vmatprep.mubr.f32.mxu0 0.0
    %229 = vmatmul.mubr.f32.gmra.mrb[0].mxu0 %v140
    %v230 = vpop.f32.mrb[0].mxu0
    %v231 = vadd.f32 %v162, %v230
    %v232 = vpop.f32.mrb[0].mxu0
    %233 = vdwg.mxu0
    %v234 = vmax.f32 %v231, 0.0
    %v235 = vld [vmem:[%s5] sm:$0x1]
    %v237 = vlaneseq
    %v238 = vshrl.u32 %v237, 7
    %v239 = vsub.s32 0, %v238
    %v240 = vrot.slane %v235, %v239
    %v242 = vmul.f32 %v234, %v240
    %243 = vadd.xlane.f32.xlu0 %v242
    %v244 = vpop.xlane.xlu0 %243
    %v245 = vld [vmem:[#allocation2] sm:$0x1]
    %v247 = vlaneseq
    %v248 = vshrl.u32 %v247, 7
    %v249 = vsub.s32 0, %v248
    %v250 = vrot.slane %v245, %v249
    %v252 = vadd.f32 %v244, %v250
    %vm253 = vcmask 7168
    %254 = vst.msk [vmem:[#allocation7] sm:$0xff] %vm253, %v252
    // Predicated region
    $region38: #{tpu_custom_call.1} parent=1 // pred_check
      _
    $region39: #{tpu_custom_call.1} parent=1 // pred_check_branch
      %256 = sbr.rel (0) target = $region41
    $region40: #{tpu_custom_call.1} parent=1 // pred_region
      // Predicated region
      $region42: #{tpu_custom_call.1} parent=40 // pred_check
        _
      $region43: #{tpu_custom_call.1} parent=40 // pred_check_branch
        %258 = sbr.rel (0) target = $region45
      $region44: #{tpu_custom_call.1} parent=40 // pred_region
        // Predicated region
        $region46: #{tpu_custom_call.1} parent=44 // pred_check
          _
        $region47: #{tpu_custom_call.1} parent=44 // pred_check_branch
          %260 = sbr.rel target = $region49
        $region48: #{tpu_custom_call.1} parent=44 // pred_region
          // Predicated region
          $region61: #{tpu_custom_call.1} parent=48 // pred_check
            _
          $region62: #{tpu_custom_call.1} parent=48 // pred_check_branch
            %275 = sbr.rel (0) target = $region64
          $region63: #{tpu_custom_call.1} parent=48 // pred_region
            loop: start=0, step=1, limit=1
            $region65: #{tpu_custom_call.1} parent=63 // loop_pre_header
              _
            $region66: #{tpu_custom_call.1} parent=63 // loop_header
              %s278 = sphi 0, %s282
              %p279 = scmp.ge.s32.totalorder %s278, 1
              %s283 = sphi [#allocation7], [#allocation7]
              %s284 = sphi %s7, %s7
            $region67: #{tpu_custom_call.1} parent=63 // loop_header_branch
              %281 = sbr.rel (%p279) target = $region71
            $region68: #{tpu_custom_call.1} parent=63 // loop_body
              %v285 = vld [vmem:[%s283] sm:$0x3]
              %286 = vst [vmem:[%s284] sm:$0x3] %v285
            $region69: #{tpu_custom_call.1} parent=63 // loop_footer
              %s282 = sadd.s32 1, %s278
            $region70: #{tpu_custom_call.1} parent=63 // loop_footer_branch
              %277 = sbr.rel target = $region66
            $region71: #{tpu_custom_call.1} parent=63 // loop_exit
              _
          $region64: #{tpu_custom_call.1} parent=48 // pred_fallthru
            _
        $region49: #{tpu_custom_call.1} parent=44 // pred_fallthru
          _
        // Predicated region
        $region50: #{tpu_custom_call.1} parent=44 // pred_check
          _
        $region51: #{tpu_custom_call.1} parent=44 // pred_check_branch
          %262 = sbr.rel (0) target = $region53
        $region52: #{tpu_custom_call.1} parent=44 // pred_region
          loop: start=0, step=1, limit=1
          $region54: #{tpu_custom_call.1} parent=52 // loop_pre_header
            _
          $region55: #{tpu_custom_call.1} parent=52 // loop_header
            %s265 = sphi 0, %s269
            %p266 = scmp.ge.s32.totalorder %s265, 1
            %s270 = sphi [#allocation7], [#allocation7]
            %s271 = sphi %s7, %s7
          $region56: #{tpu_custom_call.1} parent=52 // loop_header_branch
            %268 = sbr.rel (%p266) target = $region60
          $region57: #{tpu_custom_call.1} parent=52 // loop_body
            %v272 = vld [vmem:[%s270] sm:$0x3]
            %273 = vst [vmem:[%s271] sm:$0x3] %v272
          $region58: #{tpu_custom_call.1} parent=52 // loop_footer
            %s269 = sadd.s32 1, %s265
          $region59: #{tpu_custom_call.1} parent=52 // loop_footer_branch
            %264 = sbr.rel target = $region55
          $region60: #{tpu_custom_call.1} parent=52 // loop_exit
            _
        $region53: #{tpu_custom_call.1} parent=44 // pred_fallthru
          _
      $region45: #{tpu_custom_call.1} parent=40 // pred_fallthru
        _
      %287 = vnop
    $region41: #{tpu_custom_call.1} parent=1 // pred_fallthru
      _
    // Predicated region
    $region72: #{tpu_custom_call.1} parent=1 // pred_check
      _
    $region73: #{tpu_custom_call.1} parent=1 // pred_check_branch
      %289 = sbr.rel (0) target = $region75
    $region74: #{tpu_custom_call.1} parent=1 // pred_region
      _
    $region75: #{tpu_custom_call.1} parent=1 // pred_fallthru
      _
    %290 = vsyncpa [#allocation4], 1
    %291 = vsyncpa [#allocation6], 1

</llo_original>
